<compile_context>
chip_gen: v5e
topology: v5e:2x2
jax: 0.10.0
libtpu: 0.0.40
codegen_flags: <defaults>
</compile_context>

<pallas_src>
import math

import jax
import jax.numpy as jnp
from jax.experimental import pallas as pl
from jax.experimental.pallas import tpu as pltpu

_INV_SQRT2 = 1.0 / math.sqrt(2.0)


def _gelu_exact_f32(h):
    # nn.GELU(approximate='none'): 0.5 * x * (1 + erf(x / sqrt(2))), in f32.
    return 0.5 * h * (1.0 + jax.lax.erf(h * _INV_SQRT2))


# ----------------------------------------------------------------------------
# Kernel bodies
# ----------------------------------------------------------------------------
def _mlp_kernel_resident(x_ref, w1_ref, b1_ref, w2_ref, b2_ref, o_ref):
    """Whole hidden dim per step; weights are VMEM-resident across the grid."""
    h = jnp.dot(x_ref[...], w1_ref[...], preferred_element_type=jnp.float32)
    h = _gelu_exact_f32(h + b1_ref[...])
    h = h.astype(w2_ref.dtype)
    o_ref[...] = (jnp.dot(h, w2_ref[...], preferred_element_type=jnp.float32)
                  + b2_ref[...]).astype(o_ref.dtype)


def _mlp_kernel_hsplit_direct(x_ref, w1_ref, b1_ref, w2_ref, b2_ref, o_ref):
    """Hidden axis split; f32 output block doubles as the accumulator (its
    block index is constant across the h axis, so it stays VMEM-resident)."""
    h_idx = pl.program_id(1)

    @pl.when(h_idx == 0)
    def _init():
        o_ref[...] = jnp.broadcast_to(b2_ref[...], o_ref.shape)

    h = jnp.dot(x_ref[...], w1_ref[...], preferred_element_type=jnp.float32)
    h = _gelu_exact_f32(h + b1_ref[...])
    h = h.astype(w2_ref.dtype)
    o_ref[...] += jnp.dot(h, w2_ref[...], preferred_element_type=jnp.float32)


def _mlp_kernel_hsplit_scratch(x_ref, w1_ref, b1_ref, w2_ref, b2_ref, o_ref,
                               acc_ref):
    """Hidden axis split; f32 VMEM scratch accumulator (non-f32 outputs)."""
    h_idx = pl.program_id(1)

    @pl.when(h_idx == 0)
    def _init():
        acc_ref[...] = jnp.zeros_like(acc_ref)

    h = jnp.dot(x_ref[...], w1_ref[...], preferred_element_type=jnp.float32)
    h = _gelu_exact_f32(h + b1_ref[...])
    h = h.astype(w2_ref.dtype)
    acc_ref[...] += jnp.dot(h, w2_ref[...], preferred_element_type=jnp.float32)

    @pl.when(h_idx == pl.num_programs(1) - 1)
    def _finalize():
        o_ref[...] = (acc_ref[...] + b2_ref[...]).astype(o_ref.dtype)


# ----------------------------------------------------------------------------
# Tiling helpers
# ----------------------------------------------------------------------------
def _largest_divisor_tile(total, granule, cap):
    """Largest d <= cap with total % d == 0 and d % granule == 0, else total."""
    if total <= cap:
        return total
    d = (cap // granule) * granule
    while d >= granule:
        if total % d == 0:
            return d
        d -= granule
    return total


def _vmem_budget_bytes():
    """Per-TensorCore VMEM the kernel plans against (generation aware)."""
    try:
        cap = int(pltpu.get_tpu_info().vmem_capacity_bytes)
    except Exception:
        cap = 64 << 20  # conservative default (v7x per-TC physical size)
    # Leave headroom for Mosaic internal scratch / semaphores / metadata:
    #   64 MiB part  -> ~48 MiB budget, 128 MiB part -> ~108 MiB budget.
    return max(32 << 20, min(cap - (16 << 20), int(0.85 * cap)))


def _resident_vmem_bytes(row_tile, c_in, h, c_out, in_bytes, out_bytes):
    weights = (c_in * h + h * c_out) * in_bytes + (h + c_out) * 4  # 1-buffered
    x_buf = 2 * row_tile * c_in * in_bytes
    o_buf = 2 * row_tile * c_out * out_bytes
    inter = 2 * row_tile * h * 4  # f32 pre-GELU activation + cast copy
    return weights + x_buf + o_buf + inter


def _split_vmem_bytes(row_tile, h_tile, c_in, c_out, in_bytes, out_bytes,
                      use_scratch):
    x_buf = 2 * row_tile * c_in * in_bytes
    w_buf = 2 * ((c_in * h_tile + h_tile * c_out) * in_bytes
                 + (h_tile + c_out) * 4)
    o_buf = 2 * row_tile * c_out * out_bytes
    acc = row_tile * c_out * 4 if use_scratch else 0
    inter = 2 * row_tile * h_tile * 4
    return x_buf + w_buf + o_buf + acc + inter


def prepare_ffn_params(w1, b1, w2, b2, compute_dtype=jnp.bfloat16):
    """Cast weights to the MXU compute dtype ONCE (outside the per-step call)
    so the cast HBM traffic is not re-paid on every forward."""
    return (jnp.asarray(w1, compute_dtype), jnp.asarray(b1, jnp.float32),
            jnp.asarray(w2, compute_dtype), jnp.asarray(b2, jnp.float32))


# ----------------------------------------------------------------------------
# Wrapper
# ----------------------------------------------------------------------------
def pointwise_feed_forward(x, w1, b1, w2, b2, *, row_tile=None, hidden_tile=None,
                           compute_dtype=jnp.bfloat16, out_dtype=None,
                           interpret=False):
    """x: (B, N, C_in) -> (B, N, C_out).  Dropout prob is 0.0 (inference).

    compute_dtype defaults to bfloat16 (matmuls on the MXU in bf16, f32
    accumulation, f32 bias/GELU math).  Pass compute_dtype=jnp.float32 for the
    high-precision path.  For repeated calls, pre-cast the weights with
    prepare_ffn_params so the per-call .astype becomes a no-op.
    """
    B, N, C_in = x.shape
    H = w1.shape[1]
    C_out = w2.shape[1]
    M = B * N
    out_dtype = jnp.dtype(out_dtype or x.dtype)
    cdt = jnp.dtype(compute_dtype)

    # astype is a no-op when the inputs were pre-cast to the compute dtype.
    x2d = x.reshape(M, C_in).astype(cdt)
    w1c = w1.astype(cdt)
    w2c = w2.astype(cdt)
    b1_2d = b1.reshape(1, H).astype(jnp.float32)
    b2_2d = b2.reshape(1, C_out).astype(jnp.float32)

    in_bytes = cdt.itemsize
    out_bytes = out_dtype.itemsize
    budget = _vmem_budget_bytes()

    # ---- hidden (reduction) tiling ----------------------------------------
    if hidden_tile is None:
        # Prefer fully resident weights (hidden_tile == H): weight HBM traffic
        # is paid once, not once per row block.
        if _resident_vmem_bytes(16, C_in, H, C_out, in_bytes, out_bytes) <= budget:
            hidden_tile = H
        else:
            hidden_tile = _largest_divisor_tile(H, 256, max(256, H // 2))
            if H % hidden_tile != 0:
                hidden_tile = _largest_divisor_tile(H, 128, max(128, H // 2))
    if H % hidden_tile != 0 or (hidden_tile != H and hidden_tile % 128 != 0):
        hidden_tile = H  # fall back to un-split H (no masking on the K axis)
    n_h = H // hidden_tile
    use_scratch = (n_h > 1) and (out_dtype != jnp.float32)

    # ---- row tiling --------------------------------------------------------
    if row_tile is None:
        # Large row tiles amortize weight traffic and the ~0.35 us/step
        # overhead; ridge points are ~240-656 flops per streamed weight byte.
        desired = 512 if in_bytes <= 2 else 1024
        if n_h > 1:
            desired *= 2  # streamed weights need more rows to pass the ridge
        row_tile = M if M <= desired else desired
    if row_tile >= M:
        row_tile = M
    else:
        row_tile = max(16, (row_tile // 16) * 16)

    def _fits(rt):
        if n_h == 1:
            return _resident_vmem_bytes(rt, C_in, H, C_out, in_bytes,
                                        out_bytes) <= budget
        return _split_vmem_bytes(rt, hidden_tile, C_in, C_out, in_bytes,
                                 out_bytes, use_scratch) <= budget

    while row_tile > 16 and not _fits(row_tile):
        row_tile = max(16, ((row_tile // 2) // 16) * 16)

    n_rows = pl.cdiv(M, row_tile)

    # ---- cost estimate / VMEM limit ----------------------------------------
    flops = 2 * M * C_in * H + 2 * M * H * C_out
    weight_bytes = (w1c.size + w2c.size) * in_bytes + (b1_2d.size + b2_2d.size) * 4
    weight_passes = 1 if n_h == 1 else n_rows
    cost = pl.CostEstimate(
        flops=flops,
        transcendentals=M * H,
        bytes_accessed=int(x2d.size * in_bytes + weight_passes * weight_bytes
                           + M * C_out * out_bytes),
    )
    if n_h == 1:
        est = _resident_vmem_bytes(row_tile, C_in, H, C_out, in_bytes, out_bytes)
    else:
        est = _split_vmem_bytes(row_tile, hidden_tile, C_in, C_out, in_bytes,
                                out_bytes, use_scratch)
    vmem_limit = int(min(budget, max(32 << 20, int(1.4 * est) + (4 << 20))))

    # ---- pallas_call --------------------------------------------------------
    if n_h == 1:
        def build(single_buffer_weights):
            wkw = ({"pipeline_mode": pl.Buffered(1)}
                   if single_buffer_weights else {})
            grid_spec = pltpu.PrefetchScalarGridSpec(
                num_scalar_prefetch=0,
                grid=(n_rows,),
                in_specs=[
                    pl.BlockSpec((row_tile, C_in), lambda i: (i, 0)),
                    # Constant index maps -> weight slabs loaded once and kept
                    # resident; Buffered(1) drops the unused second buffer.
                    pl.BlockSpec((C_in, H), lambda i: (0, 0), **wkw),
                    pl.BlockSpec((1, H), lambda i: (0, 0), **wkw),
                    pl.BlockSpec((H, C_out), lambda i: (0, 0), **wkw),
                    pl.BlockSpec((1, C_out), lambda i: (0, 0), **wkw),
                ],
                out_specs=pl.BlockSpec((row_tile, C_out), lambda i: (i, 0)),
            )
            return pl.pallas_call(
                _mlp_kernel_resident,
                out_shape=jax.ShapeDtypeStruct((M, C_out), out_dtype),
                grid_spec=grid_spec,
                compiler_params=pltpu.CompilerParams(
                    dimension_semantics=("parallel",),
                    vmem_limit_bytes=vmem_limit),
                cost_estimate=cost,
                interpret=interpret,
            )

        try:
            out2d = build(True)(x2d, w1c, b1_2d, w2c, b2_2d)
        except Exception:
            # Fallback: default double-buffering (still resident via the
            # constant index maps, just 2x weight VMEM).
            out2d = build(False)(x2d, w1c, b1_2d, w2c, b2_2d)
    else:
        kernel = (_mlp_kernel_hsplit_scratch if use_scratch
                  else _mlp_kernel_hsplit_direct)
        scratch = ([pltpu.VMEM((row_tile, C_out), jnp.float32)]
                   if use_scratch else [])
        grid_spec = pltpu.PrefetchScalarGridSpec(
            num_scalar_prefetch=0,
            grid=(n_rows, n_h),
            in_specs=[
                pl.BlockSpec((row_tile, C_in), lambda i, h: (i, 0)),
                pl.BlockSpec((C_in, hidden_tile), lambda i, h: (0, h)),
                pl.BlockSpec((1, hidden_tile), lambda i, h: (0, h)),
                pl.BlockSpec((hidden_tile, C_out), lambda i, h: (h, 0)),
                pl.BlockSpec((1, C_out), lambda i, h: (0, 0)),
            ],
            out_specs=pl.BlockSpec((row_tile, C_out), lambda i, h: (i, 0)),
            scratch_shapes=scratch,
        )
        out2d = pl.pallas_call(
            kernel,
            out_shape=jax.ShapeDtypeStruct((M, C_out), out_dtype),
            grid_spec=grid_spec,
            compiler_params=pltpu.CompilerParams(
                dimension_semantics=("parallel", "arbitrary"),
                vmem_limit_bytes=vmem_limit),
            cost_estimate=cost,
            interpret=interpret,
        )(x2d, w1c, b1_2d, w2c, b2_2d)

    return out2d.reshape(B, N, C_out)


# ----------------------------------------------------------------------------
# Reference + tests
# ----------------------------------------------------------------------------
def _reference(x, w1, b1, w2, b2):
    hp = jax.lax.Precision.HIGHEST
    xf = x.astype(jnp.float32)
    h = jnp.einsum("bnc,ch->bnh", xf, w1.astype(jnp.float32), precision=hp) + b1
    h = 0.5 * h * (1.0 + jax.lax.erf(h * _INV_SQRT2))
    return jnp.einsum("bnh,ho->bno", h, w2.astype(jnp.float32), precision=hp) + b2


def _make_params(key, C_in, H, C_out):
    k1, k2, k3, k4 = jax.random.split(key, 4)
    bound1 = 1.0 / math.sqrt(C_in)
    bound2 = 1.0 / math.sqrt(H)
    w1 = jax.random.uniform(k1, (C_in, H), jnp.float32, -bound1, bound1)
    b1 = jax.random.uniform(k2, (H,), jnp.float32, -bound1, bound1)
    w2 = jax.random.uniform(k3, (H, C_out), jnp.float32, -bound2, bound2)
    b2 = jax.random.uniform(k4, (C_out,), jnp.float32, -bound2, bound2)
    return w1, b1, w2, b2


if __name__ == "__main__":
    key = jax.random.PRNGKey(0)
    ka, kb = jax.random.split(key)

    # --- Test A: tiny shape, resident 1-D-grid path, f32 compute ------------
    B, N, C_in = 2, 8, 32
    H, C_out = 2 * C_in, C_in
    kx, kp = jax.random.split(ka)
    x = jax.random.normal(kx, (B, N, C_in), dtype=jnp.float32)
    w1, b1, w2, b2 = _make_params(kp, C_in, H, C_out)
    out = jax.block_until_ready(
        pointwise_feed_forward(x, w1, b1, w2, b2, compute_dtype=jnp.float32))
    ref = _reference(x, w1, b1, w2, b2)
    assert out.shape == (B, N, C_out)
    assert jnp.allclose(out, ref, atol=1e-4, rtol=1e-4), "mismatch (tiny f32)"

    # --- Test B: hidden-split path, f32 output accumulated into o_ref -------
    B, N, C_in = 2, 256, 128
    H, C_out = 4 * C_in, C_in  # DiT-style mlp_ratio = 4
    kx, kp = jax.random.split(kb)
    x = jax.random.normal(kx, (B, N, C_in), dtype=jnp.float32)
    w1, b1, w2, b2 = _make_params(kp, C_in, H, C_out)
    ref = _reference(x, w1, b1, w2, b2)
    out = jax.block_until_ready(
        pointwise_feed_forward(x, w1, b1, w2, b2, row_tile=128, hidden_tile=256,
                               compute_dtype=jnp.float32))
    assert out.shape == (B, N, C_out)
    assert jnp.allclose(out, ref, atol=2e-4, rtol=2e-4), "mismatch (split f32)"

    # --- Test C: default bf16 resident fast path (pre-cast weights once) ----
    w1b, b1b, w2b, b2b = prepare_ffn_params(w1, b1, w2, b2, jnp.bfloat16)
    out_bf16 = jax.block_until_ready(
        pointwise_feed_forward(x, w1b, b1b, w2b, b2b, out_dtype=jnp.float32))
    assert jnp.allclose(out_bf16, ref, atol=5e-2, rtol=5e-2), "mismatch (bf16)"

    # --- Test D: hidden-split path with bf16 output (scratch accumulator) ---
    out_d = jax.block_until_ready(
        pointwise_feed_forward(x, w1b, b1b, w2b, b2b, row_tile=128,
                               hidden_tile=128, out_dtype=jnp.bfloat16))
    assert jnp.allclose(out_d.astype(jnp.float32), ref, atol=7e-2, rtol=7e-2), \
        "mismatch (split bf16 out)"

    print("KERNEL_OK")
</pallas_src>

<mosaic_0001>
module attributes {stable_mosaic.version = 11 : i64} {
  func.func @_mlp_kernel_resident(%arg0: i32, %arg1: memref<16x32xf32, #tpu.memory_space<vmem>>, %arg2: memref<32x64xf32, #tpu.memory_space<vmem>>, %arg3: memref<1x64xf32, #tpu.memory_space<vmem>>, %arg4: memref<64x32xf32, #tpu.memory_space<vmem>>, %arg5: memref<1x32xf32, #tpu.memory_space<vmem>>, %arg6: memref<16x32xf32, #tpu.memory_space<vmem>>) attributes {dimension_semantics = [#tpu.dimension_semantics<parallel>], iteration_bounds = array<i64: 1>, scalar_prefetch = 0 : i64, scratch_operands = 0 : i64, tpu.core_type = #tpu.core_type<tc>, window_params = [{transform_indices = @transform_0, window_bounds = array<i64: 16, 32>}, {pipeline_mode = #tpu.pipeline_mode<synchronous>, transform_indices = @transform_1, window_bounds = array<i64: 32, 64>}, {pipeline_mode = #tpu.pipeline_mode<synchronous>, transform_indices = @transform_2, window_bounds = array<i64: 1, 64>}, {pipeline_mode = #tpu.pipeline_mode<synchronous>, transform_indices = @transform_3, window_bounds = array<i64: 64, 32>}, {pipeline_mode = #tpu.pipeline_mode<synchronous>, transform_indices = @transform_4, window_bounds = array<i64: 1, 32>}, {transform_indices = @transform_5, window_bounds = array<i64: 16, 32>}]} {
    %c0 = arith.constant 0 : index
    %c0_0 = arith.constant 0 : index
    %0 = vector.load %arg1[%c0, %c0_0] : memref<16x32xf32, #tpu.memory_space<vmem>>, vector<16x32xf32>
    %c0_1 = arith.constant 0 : index
    %c0_2 = arith.constant 0 : index
    %1 = vector.load %arg2[%c0_1, %c0_2] : memref<32x64xf32, #tpu.memory_space<vmem>>, vector<32x64xf32>
    %cst = arith.constant dense<0.000000e+00> : vector<16x64xf32>
    %2 = tpu.matmul %0, %1, %cst {dimension_numbers = #tpu.dot_dimension_numbers<[1], [0], [0], [1], [0, 0, 1, 1], [], []>} : vector<16x32xf32>, vector<32x64xf32>, vector<16x64xf32> -> vector<16x64xf32>
    %c0_3 = arith.constant 0 : index
    %c0_4 = arith.constant 0 : index
    %3 = vector.load %arg3[%c0_3, %c0_4] : memref<1x64xf32, #tpu.memory_space<vmem>>, vector<1x64xf32>
    %4 = vector.broadcast %3 : vector<1x64xf32> to vector<16x64xf32>
    %5 = arith.addf %2, %4 : vector<16x64xf32>
    %cst_5 = arith.constant 5.000000e-01 : f32
    %6 = vector.broadcast %cst_5 : f32 to vector<16x64xf32>
    %7 = arith.mulf %6, %5 : vector<16x64xf32>
    %cst_6 = arith.constant 0.707106769 : f32
    %8 = vector.broadcast %cst_6 : f32 to vector<16x64xf32>
    %9 = arith.mulf %5, %8 : vector<16x64xf32>
    %10 = math.erf %9 : vector<16x64xf32>
    %cst_7 = arith.constant 1.000000e+00 : f32
    %11 = vector.broadcast %cst_7 : f32 to vector<16x64xf32>
    %12 = arith.addf %11, %10 : vector<16x64xf32>
    %13 = arith.mulf %7, %12 : vector<16x64xf32>
    %c0_8 = arith.constant 0 : index
    %c0_9 = arith.constant 0 : index
    %14 = vector.load %arg4[%c0_8, %c0_9] : memref<64x32xf32, #tpu.memory_space<vmem>>, vector<64x32xf32>
    %cst_10 = arith.constant dense<0.000000e+00> : vector<16x32xf32>
    %15 = tpu.matmul %13, %14, %cst_10 {dimension_numbers = #tpu.dot_dimension_numbers<[1], [0], [0], [1], [0, 0, 1, 1], [], []>} : vector<16x64xf32>, vector<64x32xf32>, vector<16x32xf32> -> vector<16x32xf32>
    %c0_11 = arith.constant 0 : index
    %c0_12 = arith.constant 0 : index
    %16 = vector.load %arg5[%c0_11, %c0_12] : memref<1x32xf32, #tpu.memory_space<vmem>>, vector<1x32xf32>
    %17 = vector.broadcast %16 : vector<1x32xf32> to vector<16x32xf32>
    %18 = arith.addf %15, %17 : vector<16x32xf32>
    %c0_13 = arith.constant 0 : index
    %c0_14 = arith.constant 0 : index
    %19 = vector.load %arg6[%c0_13, %c0_14] : memref<16x32xf32, #tpu.memory_space<vmem>>, vector<16x32xf32>
    tpu.vector_store %arg6[%c0_13, %c0_14], %18 {strides = array<i32>} : memref<16x32xf32, #tpu.memory_space<vmem>>, vector<16x32xf32>,
    return
  }
  func.func @transform_0(%arg0: i32) -> (i32, i32) {
    %c0_i32 = arith.constant 0 : i32
    %c0_i32_0 = arith.constant 0 : i32
    return %arg0, %c0_i32 : i32, i32
  }
  func.func @transform_1(%arg0: i32) -> (i32, i32) {
    %c0_i32 = arith.constant 0 : i32
    %c0_i32_0 = arith.constant 0 : i32
    %c0_i32_1 = arith.constant 0 : i32
    return %c0_i32, %c0_i32_0 : i32, i32
  }
  func.func @transform_2(%arg0: i32) -> (i32, i32) {
    %c0_i32 = arith.constant 0 : i32
    %c0_i32_0 = arith.constant 0 : i32
    %c0_i32_1 = arith.constant 0 : i32
    return %c0_i32, %c0_i32_0 : i32, i32
  }
  func.func @transform_3(%arg0: i32) -> (i32, i32) {
    %c0_i32 = arith.constant 0 : i32
    %c0_i32_0 = arith.constant 0 : i32
    %c0_i32_1 = arith.constant 0 : i32
    return %c0_i32, %c0_i32_0 : i32, i32
  }
  func.func @transform_4(%arg0: i32) -> (i32, i32) {
    %c0_i32 = arith.constant 0 : i32
    %c0_i32_0 = arith.constant 0 : i32
    %c0_i32_1 = arith.constant 0 : i32
    return %c0_i32, %c0_i32_0 : i32, i32
  }
  func.func @transform_5(%arg0: i32) -> (i32, i32) {
    %c0_i32 = arith.constant 0 : i32
    %c0_i32_0 = arith.constant 0 : i32
    return %arg0, %c0_i32 : i32, i32
  }
}

module attributes {stable_mosaic.version = 11 : i64} {
  func.func @_mlp_kernel_resident(%arg0: i32, %arg1: memref<16x32xf32, #tpu.memory_space<vmem>>, %arg2: memref<32x64xf32, #tpu.memory_space<vmem>>, %arg3: memref<1x64xf32, #tpu.memory_space<vmem>>, %arg4: memref<64x32xf32, #tpu.memory_space<vmem>>, %arg5: memref<1x32xf32, #tpu.memory_space<vmem>>, %arg6: memref<16x32xf32, #tpu.memory_space<vmem>>) attributes {dimension_semantics = [#tpu.dimension_semantics<parallel>], iteration_bounds = array<i64: 1>, scalar_prefetch = 0 : i64, scratch_operands = 0 : i64, tpu.core_type = #tpu.core_type<tc>, window_params = [{transform_indices = @transform_0, window_bounds = array<i64: 16, 32>}, {pipeline_mode = #tpu.pipeline_mode<synchronous>, transform_indices = @transform_1, window_bounds = array<i64: 32, 64>}, {pipeline_mode = #tpu.pipeline_mode<synchronous>, transform_indices = @transform_2, window_bounds = array<i64: 1, 64>}, {pipeline_mode = #tpu.pipeline_mode<synchronous>, transform_indices = @transform_3, window_bounds = array<i64: 64, 32>}, {pipeline_mode = #tpu.pipeline_mode<synchronous>, transform_indices = @transform_4, window_bounds = array<i64: 1, 32>}, {transform_indices = @transform_5, window_bounds = array<i64: 16, 32>}]} {
    %c0 = arith.constant 0 : index
    %c0_0 = arith.constant 0 : index
    %0 = vector.load %arg1[%c0, %c0_0] : memref<16x32xf32, #tpu.memory_space<vmem>>, vector<16x32xf32>
    %c0_1 = arith.constant 0 : index
    %c0_2 = arith.constant 0 : index
    %1 = vector.load %arg2[%c0_1, %c0_2] : memref<32x64xf32, #tpu.memory_space<vmem>>, vector<32x64xf32>
    %cst = arith.constant dense<0.000000e+00> : vector<16x64xf32>
    %2 = tpu.matmul %0, %1, %cst {dimension_numbers = #tpu.dot_dimension_numbers<[1], [0], [0], [1], [0, 0, 1, 1], [], []>} : vector<16x32xf32>, vector<32x64xf32>, vector<16x64xf32> -> vector<16x64xf32>
    %c0_3 = arith.constant 0 : index
    %c0_4 = arith.constant 0 : index
    %3 = vector.load %arg3[%c0_3, %c0_4] : memref<1x64xf32, #tpu.memory_space<vmem>>, vector<1x64xf32>
    %4 = vector.broadcast %3 : vector<1x64xf32> to vector<16x64xf32>
    %5 = arith.addf %2, %4 : vector<16x64xf32>
    %cst_5 = arith.constant 5.000000e-01 : f32
    %6 = vector.broadcast %cst_5 : f32 to vector<16x64xf32>
    %7 = arith.mulf %6, %5 : vector<16x64xf32>
    %cst_6 = arith.constant 0.707106769 : f32
    %8 = vector.broadcast %cst_6 : f32 to vector<16x64xf32>
    %9 = arith.mulf %5, %8 : vector<16x64xf32>
    %10 = math.erf %9 : vector<16x64xf32>
    %cst_7 = arith.constant 1.000000e+00 : f32
    %11 = vector.broadcast %cst_7 : f32 to vector<16x64xf32>
    %12 = arith.addf %11, %10 : vector<16x64xf32>
    %13 = arith.mulf %7, %12 : vector<16x64xf32>
    %c0_8 = arith.constant 0 : index
    %c0_9 = arith.constant 0 : index
    %14 = vector.load %arg4[%c0_8, %c0_9] : memref<64x32xf32, #tpu.memory_space<vmem>>, vector<64x32xf32>
    %cst_10 = arith.constant dense<0.000000e+00> : vector<16x32xf32>
    %15 = tpu.matmul %13, %14, %cst_10 {dimension_numbers = #tpu.dot_dimension_numbers<[1], [0], [0], [1], [0, 0, 1, 1], [], []>} : vector<16x64xf32>, vector<64x32xf32>, vector<16x32xf32> -> vector<16x32xf32>
    %c0_11 = arith.constant 0 : index
    %c0_12 = arith.constant 0 : index
    %16 = vector.load %arg5[%c0_11, %c0_12] : memref<1x32xf32, #tpu.memory_space<vmem>>, vector<1x32xf32>
    %17 = vector.broadcast %16 : vector<1x32xf32> to vector<16x32xf32>
    %18 = arith.addf %15, %17 : vector<16x32xf32>
    %c0_13 = arith.constant 0 : index
    %c0_14 = arith.constant 0 : index
    %19 = vector.load %arg6[%c0_13, %c0_14] : memref<16x32xf32, #tpu.memory_space<vmem>>, vector<16x32xf32>
    tpu.vector_store %arg6[%c0_13, %c0_14], %18 {strides = array<i32>} : memref<16x32xf32, #tpu.memory_space<vmem>>, vector<16x32xf32>,
    return
  }
  func.func @transform_0(%arg0: i32) -> (i32, i32) {
    %c0_i32 = arith.constant 0 : i32
    %c0_i32_0 = arith.constant 0 : i32
    return %arg0, %c0_i32 : i32, i32
  }
  func.func @transform_1(%arg0: i32) -> (i32, i32) {
    %c0_i32 = arith.constant 0 : i32
    %c0_i32_0 = arith.constant 0 : i32
    %c0_i32_1 = arith.constant 0 : i32
    return %c0_i32, %c0_i32_0 : i32, i32
  }
  func.func @transform_2(%arg0: i32) -> (i32, i32) {
    %c0_i32 = arith.constant 0 : i32
    %c0_i32_0 = arith.constant 0 : i32
    %c0_i32_1 = arith.constant 0 : i32
    return %c0_i32, %c0_i32_0 : i32, i32
  }
  func.func @transform_3(%arg0: i32) -> (i32, i32) {
    %c0_i32 = arith.constant 0 : i32
    %c0_i32_0 = arith.constant 0 : i32
    %c0_i32_1 = arith.constant 0 : i32
    return %c0_i32, %c0_i32_0 : i32, i32
  }
  func.func @transform_4(%arg0: i32) -> (i32, i32) {
    %c0_i32 = arith.constant 0 : i32
    %c0_i32_0 = arith.constant 0 : i32
    %c0_i32_1 = arith.constant 0 : i32
    return %c0_i32, %c0_i32_0 : i32, i32
  }
  func.func @transform_5(%arg0: i32) -> (i32, i32) {
    %c0_i32 = arith.constant 0 : i32
    %c0_i32_0 = arith.constant 0 : i32
    return %arg0, %c0_i32 : i32, i32
  }
}

</mosaic_0001>

<llo_original>
// kernel: tpu_custom_call.1
$region0: #{tpu_custom_call.1}
  #allocation0 [shape = 'u32[]', space=smem, size = 0x4, offset = 0x4, fixed_abs, tag = 'smem constant byte address 0x4 - core index']
  #allocation1 [shape = 'u32[72,128]{1,0:T(1,128)}', space=vmem, size = 0x9000, scoped, tag = 'internal scratch']
  %s0 = inlined_call_operand.vmem [shape: f32[16,32], index: 0, kind: input, shape index: {}]
  %s1 = inlined_call_operand.vmem [shape: f32[32,64], index: 1, kind: input, shape index: {}]
  %s2 = inlined_call_operand.vmem [shape: f32[1,64], index: 2, kind: input, shape index: {}]
  %s3 = inlined_call_operand.vmem [shape: f32[64,32], index: 3, kind: input, shape index: {}]
  %s4 = inlined_call_operand.vmem [shape: f32[1,32], index: 4, kind: input, shape index: {}]
  %s5 = inlined_call_operand.hbm [shape: f32[16,32], index: 5, kind: output, shape index: {}]
  %s6 = sld [smem:[#allocation0]]
  $region30: #{tpu_custom_call.1} parent=0
    _
  %s8 = ssub.s32 1, %s6
  %s9 = scalar_select 0, %s8, %s6
  $region1: #{tpu_custom_call.1} parent=0
    #allocation2 [shape = 'u8[8192]{0}', space=vmem, size = 0x2000, scoped, tag = 'output window, operand 0, single buffered']
    #allocation3 [shape = 's32[1]{0}', space=sflag, size = 0x4, scoped, tag = 'scoped memory for tpu_custom_call.1']
    %10 = vsyncpa [#allocation3], 0
    // Predicated region
    $region2: #{tpu_custom_call.1} parent=1 // pred_check
      _
    $region3: #{tpu_custom_call.1} parent=1 // pred_check_branch
      %12 = sbr.rel (0) target = $region5
    $region4: #{tpu_custom_call.1} parent=1 // pred_region
      _
    $region5: #{tpu_custom_call.1} parent=1 // pred_fallthru
      _
    // Predicated region
    $region6: #{tpu_custom_call.1} parent=1 // pred_check
      _
    $region7: #{tpu_custom_call.1} parent=1 // pred_check_branch
      %14 = sbr.rel (0) target = $region9
    $region8: #{tpu_custom_call.1} parent=1 // pred_region
      _
    $region9: #{tpu_custom_call.1} parent=1 // pred_fallthru
      _
    // Predicated region
    $region10: #{tpu_custom_call.1} parent=1 // pred_check
      _
    $region11: #{tpu_custom_call.1} parent=1 // pred_check_branch
      %16 = sbr.rel (0) target = $region13
    $region12: #{tpu_custom_call.1} parent=1 // pred_region
      _
    $region13: #{tpu_custom_call.1} parent=1 // pred_fallthru
      _
    // Predicated region
    $region14: #{tpu_custom_call.1} parent=1 // pred_check
      _
    $region15: #{tpu_custom_call.1} parent=1 // pred_check_branch
      %18 = sbr.rel (0) target = $region17
    $region16: #{tpu_custom_call.1} parent=1 // pred_region
      _
    $region17: #{tpu_custom_call.1} parent=1 // pred_fallthru
      _
    // Predicated region
    $region18: #{tpu_custom_call.1} parent=1 // pred_check
      _
    $region19: #{tpu_custom_call.1} parent=1 // pred_check_branch
      %20 = sbr.rel (0) target = $region21
    $region20: #{tpu_custom_call.1} parent=1 // pred_region
      _
    $region21: #{tpu_custom_call.1} parent=1 // pred_fallthru
      _
    %v21 = vld [vmem:[%s0] sm:$0xff]
    %v22 = vld [vmem:[%s0 + $0x8] sm:$0xff]
    %v23 = vld [vmem:[%s1] sm:$0xff]
    %v24 = vld [vmem:[%s1 + $0x8] sm:$0xff]
    %v25 = vld [vmem:[%s1 + $0x10] sm:$0xff]
    %v26 = vld [vmem:[%s1 + $0x18] sm:$0xff]
    %v27 = vld [vmem:[%s2] sm:$0x1]
    %v29 = vperm.slane %v27, 0
    %vm31 = vcmask 261120
    %v33 = vsel %vm31, %v21, 0
    %v36 = vsel %vm31, %v22, 0
    %38 = vmatpush.msra.mxu0 0.0
    %39 = vmatpush.msra.mxu0 0.0
    %40 = vmatpush.msra.mxu0 0.0
    %41 = vmatpush.msra.mxu0 0.0
    %42 = vmatpush.msra.mxu0 0.0
    %43 = vmatpush.msra.mxu0 0.0
    %44 = vmatpush.msra.mxu0 0.0
    %45 = vmatpush.msra.mxu0 0.0
    %46 = vmatpush.msra.mxu0 0.0
    %47 = vmatpush.msra.mxu0 0.0
    %48 = vmatpush.msra.mxu0 0.0
    %49 = vmatpush.msra.mxu0 0.0
    %50 = vmatpush.msra.mxu0 %v26
    %51 = vmatpush.msra.mxu0 %v25
    %52 = vmatpush.msra.mxu0 %v24
    %53 = vmatpush.msra.mxu0 %v23
    %54 = vmatmul.f32.gmra.mxu0 %v33
    %v55 = vpop.f32.mrf.mxu0
    %v56 = vadd.f32 %v29, %v55
    %57 = vmatmul.f32.gmra.mxu0 %v36
    %v58 = vpop.f32.mrf.mxu0
    %v59 = vadd.f32 %v29, %v58
    %60 = vdwg.mxu0
    %v61 = vmul.f32 %v56, 0.5
    %v62 = vmul.f32 %v59, 0.5
    %v63 = vmul.f32 %v56, 0.70710677
    %v64 = vmul.f32 %v59, 0.70710677
    %v65 = vmul.f32 %v63, %v63
    %v66 = vmin.f32 16.0, %v65
    %v67 = vmul.f32 %v66, 2.1237322e-06
    %v68 = vadd.f32 %v67, 0.00028619796
    %v69 = vmul.f32 %v66, %v68
    %v70 = vadd.f32 %v69, 0.0036580483
    %v71 = vmul.f32 %v66, %v70
    %v72 = vadd.f32 %v71, 0.05243302
    %v73 = vmul.f32 %v66, %v72
    %v74 = vadd.f32 %v73, 0.18741608
    %v75 = vmul.f32 %v66, %v74
    %v76 = vadd.f32 %v75, 1.1283791
    %v77 = vmul.f32 %v63, %v76
    %v78 = vmul.f32 %v66, 3.8918573e-05
    %v79 = vadd.f32 %v78, 0.001143296
    %v80 = vmul.f32 %v66, %v79
    %v81 = vadd.f32 %v80, 0.014752088
    %v82 = vmul.f32 %v66, %v81
    %v83 = vadd.f32 %v82, 0.112945676
    %v84 = vmul.f32 %v66, %v83
    %v85 = vadd.f32 %v84, 0.4994258
    %v86 = vmul.f32 %v66, %v85
    %v87 = vadd.f32 %v86, 1.0
    %v88 = vrcp.pop %v87
    %v89 = vmul.f32 %v87, %v88
    %v90 = vsub.f32 1.0, %v89
    %v91 = vmul.f32 %v88, %v90
    %v92 = vadd.f32 %v88, %v91
    %vm93 = vweird.f32 %v87
    %vm94 = vweird.f32 %v88
    %vm95 = vmor %vm93, %vm94
    %v96 = vsel %vm95, %v88, %v92
    %v97 = vand.u32 2147483647, %v87
    %vm98 = vcmp.eq.f32.partialorder %v97, 8.507059e+37
    %v99 = vand.u32 %v87, 2147483648
    %v100 = vor.u32 1.1754944e-38, %v99
    %v101 = vsel %vm98, %v100, %v96
    %v102 = vmul.f32 %v77, %v101
    %v103 = vmin.f32 %v102, 1.0
    %v104 = vmax.f32 %v103, -1.0
    %v105 = vmul.f32 %v64, %v64
    %v106 = vmin.f32 16.0, %v105
    %v107 = vmul.f32 %v106, 2.1237322e-06
    %v108 = vadd.f32 %v107, 0.00028619796
    %v109 = vmul.f32 %v106, %v108
    %v110 = vadd.f32 %v109, 0.0036580483
    %v111 = vmul.f32 %v106, %v110
    %v112 = vadd.f32 %v111, 0.05243302
    %v113 = vmul.f32 %v106, %v112
    %v114 = vadd.f32 %v113, 0.18741608
    %v115 = vmul.f32 %v106, %v114
    %v116 = vadd.f32 %v115, 1.1283791
    %v117 = vmul.f32 %v64, %v116
    %v118 = vmul.f32 %v106, 3.8918573e-05
    %v119 = vadd.f32 %v118, 0.001143296
    %v120 = vmul.f32 %v106, %v119
    %v121 = vadd.f32 %v120, 0.014752088
    %v122 = vmul.f32 %v106, %v121
    %v123 = vadd.f32 %v122, 0.112945676
    %v124 = vmul.f32 %v106, %v123
    %v125 = vadd.f32 %v124, 0.4994258
    %v126 = vmul.f32 %v106, %v125
    %v127 = vadd.f32 %v126, 1.0
    %v128 = vrcp.pop %v127
    %v129 = vmul.f32 %v127, %v128
    %v130 = vsub.f32 1.0, %v129
    %v131 = vmul.f32 %v128, %v130
    %v132 = vadd.f32 %v128, %v131
    %vm133 = vweird.f32 %v127
    %vm134 = vweird.f32 %v128
    %vm135 = vmor %vm133, %vm134
    %v136 = vsel %vm135, %v128, %v132
    %v137 = vand.u32 2147483647, %v127
    %vm138 = vcmp.eq.f32.partialorder %v137, 8.507059e+37
    %v139 = vand.u32 %v127, 2147483648
    %v140 = vor.u32 1.1754944e-38, %v139
    %v141 = vsel %vm138, %v140, %v136
    %v142 = vmul.f32 %v117, %v141
    %v143 = vmin.f32 %v142, 1.0
    %v144 = vmax.f32 %v143, -1.0
    %v145 = vadd.f32 %v104, 1.0
    %v146 = vadd.f32 %v144, 1.0
    %v147 = vmul.f32 %v61, %v145
    %v148 = vmul.f32 %v62, %v146
    %v149 = vld [vmem:[%s3] sm:$0xff]
    %v150 = vld [vmem:[%s3 + $0x8] sm:$0xff]
    %v151 = vld [vmem:[%s3 + $0x10] sm:$0xff]
    %v152 = vld [vmem:[%s3 + $0x18] sm:$0xff]
    %v153 = vld [vmem:[%s3 + $0x20] sm:$0xff]
    %v154 = vld [vmem:[%s3 + $0x28] sm:$0xff]
    %v155 = vld [vmem:[%s3 + $0x30] sm:$0xff]
    %v156 = vld [vmem:[%s3 + $0x38] sm:$0xff]
    %v157 = vld [vmem:[%s4] sm:$0x1]
    %v159 = vperm.slane %v157, 0
    %vm161 = vcmask 523264
    %v163 = vsel %vm161, %v147, 0
    %v166 = vsel %vm161, %v148, 0
    %168 = vmatpush.msra.mxu0 0.0
    %169 = vmatpush.msra.mxu0 0.0
    %170 = vmatpush.msra.mxu0 0.0
    %171 = vmatpush.msra.mxu0 0.0
    %172 = vmatpush.msra.mxu0 0.0
    %173 = vmatpush.msra.mxu0 0.0
    %174 = vmatpush.msra.mxu0 0.0
    %175 = vmatpush.msra.mxu0 0.0
    %176 = vmatpush.msra.mxu0 %v156
    %177 = vmatpush.msra.mxu0 %v155
    %178 = vmatpush.msra.mxu0 %v154
    %179 = vmatpush.msra.mxu0 %v153
    %180 = vmatpush.msra.mxu0 %v152
    %181 = vmatpush.msra.mxu0 %v151
    %182 = vmatpush.msra.mxu0 %v150
    %183 = vmatpush.msra.mxu0 %v149
    %184 = vmatmul.f32.gmra.mxu0 %v163
    %v185 = vpop.f32.mrf.mxu0
    %v186 = vadd.f32 %v159, %v185
    %187 = vmatmul.f32.gmra.mxu0 %v166
    %v188 = vpop.f32.mrf.mxu0
    %v189 = vadd.f32 %v159, %v188
    %190 = vdwg.mxu0
    %191 = vst.msk [vmem:[#allocation2] sm:$0xff] %vm31, %v186
    %192 = vst.msk [vmem:[#allocation2 + $0x8] sm:$0xff] %vm31, %v189
    // Predicated region
    $region22: #{tpu_custom_call.1} parent=1 // pred_check
      _
    $region23: #{tpu_custom_call.1} parent=1 // pred_check_branch
      %194 = sbr.rel (0) target = $region25
    $region24: #{tpu_custom_call.1} parent=1 // pred_region
      %196 = vsyncadd [#allocation3], 0
      %s197 = sshll.u32 [#allocation2], 4
      %s198 = int_to_ptr.vmem [resolvable:$true] %s197
      %s199 = sshll.u32 %s5, 4
      %s200 = int_to_ptr.hbm [resolvable:$true] %s199
      %205 = dma.vmem_to_hbm [thread:$0]  %s198, 256, %s200, [#allocation3], 128, 128, 8
    $region25: #{tpu_custom_call.1} parent=1 // pred_fallthru
      _
    // Predicated region
    $region26: #{tpu_custom_call.1} parent=1 // pred_check
      _
    $region27: #{tpu_custom_call.1} parent=1 // pred_check_branch
      %207 = sbr.rel (0) target = $region29
    $region28: #{tpu_custom_call.1} parent=1 // pred_region
      %209 = dma.done [#allocation3], 256
    $region29: #{tpu_custom_call.1} parent=1 // pred_fallthru
      _
    %210 = vsyncpa [#allocation3], 1

// kernel: tpu_custom_call.1
$region0: #{tpu_custom_call.1}
  #allocation0 [shape = 'u32[]', space=smem, size = 0x4, offset = 0x4, fixed_abs, tag = 'smem constant byte address 0x4 - core index']
  #allocation1 [shape = 'u32[72,128]{1,0:T(1,128)}', space=vmem, size = 0x9000, scoped, tag = 'internal scratch']
  %s0 = inlined_call_operand.vmem [shape: f32[16,32], index: 0, kind: input, shape index: {}]
  %s1 = inlined_call_operand.vmem [shape: f32[32,64], index: 1, kind: input, shape index: {}]
  %s2 = inlined_call_operand.vmem [shape: f32[1,64], index: 2, kind: input, shape index: {}]
  %s3 = inlined_call_operand.vmem [shape: f32[64,32], index: 3, kind: input, shape index: {}]
  %s4 = inlined_call_operand.vmem [shape: f32[1,32], index: 4, kind: input, shape index: {}]
  %s5 = inlined_call_operand.hbm [shape: f32[16,32], index: 5, kind: output, shape index: {}]
  %s6 = sld [smem:[#allocation0]]
  $region30: #{tpu_custom_call.1} parent=0
    _
  %s8 = ssub.s32 1, %s6
  %s9 = scalar_select 0, %s8, %s6
  $region1: #{tpu_custom_call.1} parent=0
    #allocation2 [shape = 'u8[8192]{0}', space=vmem, size = 0x2000, scoped, tag = 'output window, operand 0, single buffered']
    #allocation3 [shape = 's32[1]{0}', space=sflag, size = 0x4, scoped, tag = 'scoped memory for tpu_custom_call.1']
    %10 = vsyncpa [#allocation3], 0
    // Predicated region
    $region2: #{tpu_custom_call.1} parent=1 // pred_check
      _
    $region3: #{tpu_custom_call.1} parent=1 // pred_check_branch
      %12 = sbr.rel (0) target = $region5
    $region4: #{tpu_custom_call.1} parent=1 // pred_region
      _
    $region5: #{tpu_custom_call.1} parent=1 // pred_fallthru
      _
    // Predicated region
    $region6: #{tpu_custom_call.1} parent=1 // pred_check
      _
    $region7: #{tpu_custom_call.1} parent=1 // pred_check_branch
      %14 = sbr.rel (0) target = $region9
    $region8: #{tpu_custom_call.1} parent=1 // pred_region
      _
    $region9: #{tpu_custom_call.1} parent=1 // pred_fallthru
      _
    // Predicated region
    $region10: #{tpu_custom_call.1} parent=1 // pred_check
      _
    $region11: #{tpu_custom_call.1} parent=1 // pred_check_branch
      %16 = sbr.rel (0) target = $region13
    $region12: #{tpu_custom_call.1} parent=1 // pred_region
      _
    $region13: #{tpu_custom_call.1} parent=1 // pred_fallthru
      _
    // Predicated region
    $region14: #{tpu_custom_call.1} parent=1 // pred_check
      _
    $region15: #{tpu_custom_call.1} parent=1 // pred_check_branch
      %18 = sbr.rel (0) target = $region17
    $region16: #{tpu_custom_call.1} parent=1 // pred_region
      _
    $region17: #{tpu_custom_call.1} parent=1 // pred_fallthru
      _
    // Predicated region
    $region18: #{tpu_custom_call.1} parent=1 // pred_check
      _
    $region19: #{tpu_custom_call.1} parent=1 // pred_check_branch
      %20 = sbr.rel (0) target = $region21
    $region20: #{tpu_custom_call.1} parent=1 // pred_region
      _
    $region21: #{tpu_custom_call.1} parent=1 // pred_fallthru
      _
    %v21 = vld [vmem:[%s0] sm:$0xff]
    %v22 = vld [vmem:[%s0 + $0x8] sm:$0xff]
    %v23 = vld [vmem:[%s1] sm:$0xff]
    %v24 = vld [vmem:[%s1 + $0x8] sm:$0xff]
    %v25 = vld [vmem:[%s1 + $0x10] sm:$0xff]
    %v26 = vld [vmem:[%s1 + $0x18] sm:$0xff]
    %v27 = vld [vmem:[%s2] sm:$0x1]
    %v29 = vperm.slane %v27, 0
    %vm31 = vcmask 261120
    %v33 = vsel %vm31, %v21, 0
    %v36 = vsel %vm31, %v22, 0
    %38 = vmatpush.msra.mxu0 0.0
    %39 = vmatpush.msra.mxu0 0.0
    %40 = vmatpush.msra.mxu0 0.0
    %41 = vmatpush.msra.mxu0 0.0
    %42 = vmatpush.msra.mxu0 0.0
    %43 = vmatpush.msra.mxu0 0.0
    %44 = vmatpush.msra.mxu0 0.0
    %45 = vmatpush.msra.mxu0 0.0
    %46 = vmatpush.msra.mxu0 0.0
    %47 = vmatpush.msra.mxu0 0.0
    %48 = vmatpush.msra.mxu0 0.0
    %49 = vmatpush.msra.mxu0 0.0
    %50 = vmatpush.msra.mxu0 %v26
    %51 = vmatpush.msra.mxu0 %v25
    %52 = vmatpush.msra.mxu0 %v24
    %53 = vmatpush.msra.mxu0 %v23
    %54 = vmatmul.f32.gmra.mxu0 %v33
    %v55 = vpop.f32.mrf.mxu0
    %v56 = vadd.f32 %v29, %v55
    %57 = vmatmul.f32.gmra.mxu0 %v36
    %v58 = vpop.f32.mrf.mxu0
    %v59 = vadd.f32 %v29, %v58
    %60 = vdwg.mxu0
    %v61 = vmul.f32 %v56, 0.5
    %v62 = vmul.f32 %v59, 0.5
    %v63 = vmul.f32 %v56, 0.70710677
    %v64 = vmul.f32 %v59, 0.70710677
    %v65 = vmul.f32 %v63, %v63
    %v66 = vmin.f32 16.0, %v65
    %v67 = vmul.f32 %v66, 2.1237322e-06
    %v68 = vadd.f32 %v67, 0.00028619796
    %v69 = vmul.f32 %v66, %v68
    %v70 = vadd.f32 %v69, 0.0036580483
    %v71 = vmul.f32 %v66, %v70
    %v72 = vadd.f32 %v71, 0.05243302
    %v73 = vmul.f32 %v66, %v72
    %v74 = vadd.f32 %v73, 0.18741608
    %v75 = vmul.f32 %v66, %v74
    %v76 = vadd.f32 %v75, 1.1283791
    %v77 = vmul.f32 %v63, %v76
    %v78 = vmul.f32 %v66, 3.8918573e-05
    %v79 = vadd.f32 %v78, 0.001143296
    %v80 = vmul.f32 %v66, %v79
    %v81 = vadd.f32 %v80, 0.014752088
    %v82 = vmul.f32 %v66, %v81
    %v83 = vadd.f32 %v82, 0.112945676
    %v84 = vmul.f32 %v66, %v83
    %v85 = vadd.f32 %v84, 0.4994258
    %v86 = vmul.f32 %v66, %v85
    %v87 = vadd.f32 %v86, 1.0
    %v88 = vrcp.pop %v87
    %v89 = vmul.f32 %v87, %v88
    %v90 = vsub.f32 1.0, %v89
    %v91 = vmul.f32 %v88, %v90
    %v92 = vadd.f32 %v88, %v91
    %vm93 = vweird.f32 %v87
    %vm94 = vweird.f32 %v88
    %vm95 = vmor %vm93, %vm94
    %v96 = vsel %vm95, %v88, %v92
    %v97 = vand.u32 2147483647, %v87
    %vm98 = vcmp.eq.f32.partialorder %v97, 8.507059e+37
    %v99 = vand.u32 %v87, 2147483648
    %v100 = vor.u32 1.1754944e-38, %v99
    %v101 = vsel %vm98, %v100, %v96
    %v102 = vmul.f32 %v77, %v101
    %v103 = vmin.f32 %v102, 1.0
    %v104 = vmax.f32 %v103, -1.0
    %v105 = vmul.f32 %v64, %v64
    %v106 = vmin.f32 16.0, %v105
    %v107 = vmul.f32 %v106, 2.1237322e-06
    %v108 = vadd.f32 %v107, 0.00028619796
    %v109 = vmul.f32 %v106, %v108
    %v110 = vadd.f32 %v109, 0.0036580483
    %v111 = vmul.f32 %v106, %v110
    %v112 = vadd.f32 %v111, 0.05243302
    %v113 = vmul.f32 %v106, %v112
    %v114 = vadd.f32 %v113, 0.18741608
    %v115 = vmul.f32 %v106, %v114
    %v116 = vadd.f32 %v115, 1.1283791
    %v117 = vmul.f32 %v64, %v116
    %v118 = vmul.f32 %v106, 3.8918573e-05
    %v119 = vadd.f32 %v118, 0.001143296
    %v120 = vmul.f32 %v106, %v119
    %v121 = vadd.f32 %v120, 0.014752088
    %v122 = vmul.f32 %v106, %v121
    %v123 = vadd.f32 %v122, 0.112945676
    %v124 = vmul.f32 %v106, %v123
    %v125 = vadd.f32 %v124, 0.4994258
    %v126 = vmul.f32 %v106, %v125
    %v127 = vadd.f32 %v126, 1.0
    %v128 = vrcp.pop %v127
    %v129 = vmul.f32 %v127, %v128
    %v130 = vsub.f32 1.0, %v129
    %v131 = vmul.f32 %v128, %v130
    %v132 = vadd.f32 %v128, %v131
    %vm133 = vweird.f32 %v127
    %vm134 = vweird.f32 %v128
    %vm135 = vmor %vm133, %vm134
    %v136 = vsel %vm135, %v128, %v132
    %v137 = vand.u32 2147483647, %v127
    %vm138 = vcmp.eq.f32.partialorder %v137, 8.507059e+37
    %v139 = vand.u32 %v127, 2147483648
    %v140 = vor.u32 1.1754944e-38, %v139
    %v141 = vsel %vm138, %v140, %v136
    %v142 = vmul.f32 %v117, %v141
    %v143 = vmin.f32 %v142, 1.0
    %v144 = vmax.f32 %v143, -1.0
    %v145 = vadd.f32 %v104, 1.0
    %v146 = vadd.f32 %v144, 1.0
    %v147 = vmul.f32 %v61, %v145
    %v148 = vmul.f32 %v62, %v146
    %v149 = vld [vmem:[%s3] sm:$0xff]
    %v150 = vld [vmem:[%s3 + $0x8] sm:$0xff]
    %v151 = vld [vmem:[%s3 + $0x10] sm:$0xff]
    %v152 = vld [vmem:[%s3 + $0x18] sm:$0xff]
    %v153 = vld [vmem:[%s3 + $0x20] sm:$0xff]
    %v154 = vld [vmem:[%s3 + $0x28] sm:$0xff]
    %v155 = vld [vmem:[%s3 + $0x30] sm:$0xff]
    %v156 = vld [vmem:[%s3 + $0x38] sm:$0xff]
    %v157 = vld [vmem:[%s4] sm:$0x1]
    %v159 = vperm.slane %v157, 0
    %vm161 = vcmask 523264
    %v163 = vsel %vm161, %v147, 0
    %v166 = vsel %vm161, %v148, 0
    %168 = vmatpush.msra.mxu0 0.0
    %169 = vmatpush.msra.mxu0 0.0
    %170 = vmatpush.msra.mxu0 0.0
    %171 = vmatpush.msra.mxu0 0.0
    %172 = vmatpush.msra.mxu0 0.0
    %173 = vmatpush.msra.mxu0 0.0
    %174 = vmatpush.msra.mxu0 0.0
    %175 = vmatpush.msra.mxu0 0.0
    %176 = vmatpush.msra.mxu0 %v156
    %177 = vmatpush.msra.mxu0 %v155
    %178 = vmatpush.msra.mxu0 %v154
    %179 = vmatpush.msra.mxu0 %v153
    %180 = vmatpush.msra.mxu0 %v152
    %181 = vmatpush.msra.mxu0 %v151
    %182 = vmatpush.msra.mxu0 %v150
    %183 = vmatpush.msra.mxu0 %v149
    %184 = vmatmul.f32.gmra.mxu0 %v163
    %v185 = vpop.f32.mrf.mxu0
    %v186 = vadd.f32 %v159, %v185
    %187 = vmatmul.f32.gmra.mxu0 %v166
    %v188 = vpop.f32.mrf.mxu0
    %v189 = vadd.f32 %v159, %v188
    %190 = vdwg.mxu0
    %191 = vst.msk [vmem:[#allocation2] sm:$0xff] %vm31, %v186
    %192 = vst.msk [vmem:[#allocation2 + $0x8] sm:$0xff] %vm31, %v189
    // Predicated region
    $region22: #{tpu_custom_call.1} parent=1 // pred_check
      _
    $region23: #{tpu_custom_call.1} parent=1 // pred_check_branch
      %194 = sbr.rel (0) target = $region25
    $region24: #{tpu_custom_call.1} parent=1 // pred_region
      %196 = vsyncadd [#allocation3], 0
      %s197 = sshll.u32 [#allocation2], 4
      %s198 = int_to_ptr.vmem [resolvable:$true] %s197
      %s199 = sshll.u32 %s5, 4
      %s200 = int_to_ptr.hbm [resolvable:$true] %s199
      %205 = dma.vmem_to_hbm [thread:$0]  %s198, 256, %s200, [#allocation3], 128, 128, 8
    $region25: #{tpu_custom_call.1} parent=1 // pred_fallthru
      _
    // Predicated region
    $region26: #{tpu_custom_call.1} parent=1 // pred_check
      _
    $region27: #{tpu_custom_call.1} parent=1 // pred_check_branch
      %207 = sbr.rel (0) target = $region29
    $region28: #{tpu_custom_call.1} parent=1 // pred_region
      %209 = dma.done [#allocation3], 256
    $region29: #{tpu_custom_call.1} parent=1 // pred_fallthru
      _
    %210 = vsyncpa [#allocation3], 1

</llo_original>
